<compile_context>
chip_gen: v6e
topology: v6e:2x2x1
jax: 0.10.0
libtpu: 0.0.40
codegen_flags: <defaults>
</compile_context>

<pallas_src>
import jax
import jax.numpy as jnp
from jax.experimental import pallas as pl
from jax.experimental.pallas import tpu as pltpu


# ---------------------------------------------------------------------------
# Planning helpers
# ---------------------------------------------------------------------------
_VMEM_BUDGET = 40 * 1024 * 1024          # tile footprint budget (v7x: 64 MiB physical)
_FULLK_WEIGHT_BUDGET = 12 * 1024 * 1024  # double-buffered weight budget for tk = K


def _round_up(x, m):
    return (x + m - 1) // m * m


def _pick_tile(dim, candidates):
    """Largest candidate tile evenly dividing `dim`; else the full dim
    (full-dim blocks are exempt from the (8,128) tiling constraint)."""
    for c in candidates:
        if c <= dim and dim % c == 0:
            return c
    return dim


def _choose_m_tile(M):
    """(tm, M_pad) for the row dim: big multiple-of-8 tiles, padding M with zero
    rows when that avoids degrading to a tiny tile (waste kept small)."""
    if M <= 8:
        return M, M                                   # full-dim block, exempt
    for tm in (512, 256, 128, 64, 32, 16, 8):
        M_pad = _round_up(M, tm)
        if M_pad == M or (M_pad - M) <= max(M // 4, 16):
            return tm, M_pad
    return 8, _round_up(M, 8)


def _footprint_bytes(tm, tk, tn, bx, bw, bo, full_k):
    # BlockSpec double-buffers every input/output block; + f32 accumulator scratch.
    fp = 2 * (tm * tk * bx + tk * tn * bw + tn * bw + tm * tn * bo)
    if not full_k:
        fp += tm * tn * 4
    return fp


def _plan_tiles(M, K, N, bx, bw, bo, force_k_tiled=False):
    """Returns (tm, tk, tn, M_pad, full_k)."""
    tn = _pick_tile(N, (512, 256, 128))
    tm, M_pad = _choose_m_tile(M)
    full_k = (not force_k_tiled) and (2 * K * tn * bw <= _FULLK_WEIGHT_BUDGET)
    if full_k:
        tk = K
    else:
        tk = _pick_tile(K, tuple(c for c in (2048, 1024, 512, 256, 128) if c < K))
        if tk == K:                 # no nice divisor of K: keep it whole
            full_k = True
    # Shrink tiles until the double-buffered footprint fits the VMEM budget.
    while _footprint_bytes(tm, tk, tn, bx, bw, bo, full_k) > _VMEM_BUDGET:
        if (not full_k) and tk > 128 and K % (tk // 2) == 0 and (tk // 2) % 128 == 0:
            tk //= 2
        elif tm % 16 == 0:
            tm //= 2
        elif tn > 128 and N % (tn // 2) == 0 and (tn // 2) % 128 == 0:
            tn //= 2
        else:
            break
    return tm, tk, tn, M_pad, full_k


def _compiler_params(n_parallel, n_reduce, footprint):
    sem = ("parallel",) * n_parallel + ("arbitrary",) * n_reduce
    vmem_limit = int(min(max(footprint + (8 << 20), 32 << 20), 56 << 20))
    return pltpu.CompilerParams(dimension_semantics=sem,
                                vmem_limit_bytes=vmem_limit)


# ---------------------------------------------------------------------------
# Kernels
# ---------------------------------------------------------------------------
def _mm_bias_kernel(x_ref, w_ref, b_ref, o_ref):
    # Full-K fast path: one MXU pass per tile, no accumulator round-trip.
    acc = jnp.dot(x_ref[...], w_ref[...], preferred_element_type=jnp.float32)
    o_ref[...] = (acc + b_ref[...].astype(jnp.float32)).astype(o_ref.dtype)


def _make_mm_bias_acc_kernel(red_axis):
    # K-tiled fallback: f32 VMEM accumulator, reduction axis last in the grid.
    def kernel(x_ref, w_ref, b_ref, o_ref, acc_ref):
        k = pl.program_id(red_axis)

        @pl.when(k == 0)
        def _():
            acc_ref[...] = jnp.zeros_like(acc_ref)

        acc_ref[...] += jnp.dot(x_ref[...], w_ref[...],
                                preferred_element_type=jnp.float32)

        @pl.when(k == pl.num_programs(red_axis) - 1)
        def _():
            o_ref[...] = (acc_ref[...] + b_ref[...].astype(jnp.float32)
                          ).astype(o_ref.dtype)

    return kernel


# ---------------------------------------------------------------------------
# Linear builders
# ---------------------------------------------------------------------------
def _linear_shared(x2d, w2d, b1d, *, force_k_tiled=False):
    """[M, K] @ [K, N] + [N] -> [M, N]."""
    M, K = x2d.shape
    K2, N = w2d.shape
    assert K2 == K and b1d.shape == (N,)
    bx, bw = x2d.dtype.itemsize, w2d.dtype.itemsize
    bo = bx
    tm, tk, tn, M_pad, full_k = _plan_tiles(M, K, N, bx, bw, bo, force_k_tiled)
    # Guarantee >=2 blocks on a parallel axis when possible (v7x has 2 TensorCores).
    if (M_pad // tm) * (N // tn) == 1 and tm % 16 == 0:
        tm //= 2
    if M_pad > M:
        x2d = jnp.pad(x2d, ((0, M_pad - M), (0, 0)))
    b2d = b1d.reshape(1, N)
    fp = _footprint_bytes(tm, tk, tn, bx, bw, bo, full_k)
    cost = pl.CostEstimate(
        flops=2 * M_pad * K * N, transcendentals=0,
        bytes_accessed=M_pad * K * bx + K * N * bw + N * bw + M_pad * N * bo)
    out_shape = jax.ShapeDtypeStruct((M_pad, N), x2d.dtype)

    if full_k:
        out = pl.pallas_call(
            _mm_bias_kernel,
            out_shape=out_shape,
            grid_spec=pltpu.PrefetchScalarGridSpec(
                num_scalar_prefetch=0,
                grid=(M_pad // tm, N // tn),
                in_specs=[
                    pl.BlockSpec((tm, K), lambda i, j: (i, 0)),
                    pl.BlockSpec((K, tn), lambda i, j: (0, j)),
                    pl.BlockSpec((1, tn), lambda i, j: (0, j)),
                ],
                out_specs=pl.BlockSpec((tm, tn), lambda i, j: (i, j)),
            ),
            compiler_params=_compiler_params(2, 0, fp),
            cost_estimate=cost,
        )(x2d, w2d, b2d)
    else:
        out = pl.pallas_call(
            _make_mm_bias_acc_kernel(2),
            out_shape=out_shape,
            grid_spec=pltpu.PrefetchScalarGridSpec(
                num_scalar_prefetch=0,
                grid=(M_pad // tm, N // tn, K // tk),
                in_specs=[
                    pl.BlockSpec((tm, tk), lambda i, j, k: (i, k)),
                    pl.BlockSpec((tk, tn), lambda i, j, k: (k, j)),
                    pl.BlockSpec((1, tn), lambda i, j, k: (0, j)),
                ],
                out_specs=pl.BlockSpec((tm, tn), lambda i, j, k: (i, j)),
                scratch_shapes=[pltpu.VMEM((tm, tn), jnp.float32)],
            ),
            compiler_params=_compiler_params(2, 1, fp),
            cost_estimate=cost,
        )(x2d, w2d, b2d)
    return out[:M] if M_pad > M else out


def _linear_individual(x3, w3, b2, *, force_k_tiled=False):
    """Per-variable Linear in a single pallas_call.
    x3: [B, n_vars, K]; w3: [n_vars, K, N]; b2: [n_vars, N] -> [B, n_vars, N]."""
    B, n_vars, K = x3.shape
    nv2, K2, N = w3.shape
    assert nv2 == n_vars and K2 == K and b2.shape == (n_vars, N)

    if n_vars > 1 and K % 128 != 0:
        # The batched kernel addresses the v-th K-slice of a flattened [B, n_vars*K]
        # input, which needs 128-aligned K blocks.  Rare correctness fallback.
        outs = [_linear_shared(x3[:, v], w3[v], b2[v], force_k_tiled=force_k_tiled)
                for v in range(n_vars)]
        return jnp.stack(outs, axis=1)

    bx, bw = x3.dtype.itemsize, w3.dtype.itemsize
    bo = bx
    tm, tk, tn, M_pad, full_k = _plan_tiles(B, K, N, bx, bw, bo, force_k_tiled)
    if n_vars * (M_pad // tm) * (N // tn) == 1 and tm % 16 == 0:
        tm //= 2
    x2 = x3.reshape(B, n_vars * K)                   # contiguous reshape, no copy
    if M_pad > B:
        x2 = jnp.pad(x2, ((0, M_pad - B), (0, 0)))
    b3 = b2.reshape(n_vars, 1, N)
    kN = K // tk
    fp = _footprint_bytes(tm, tk, tn, bx, bw, bo, full_k)
    cost = pl.CostEstimate(
        flops=2 * n_vars * M_pad * K * N, transcendentals=0,
        bytes_accessed=(M_pad * n_vars * K * bx + n_vars * K * N * bw
                        + n_vars * N * bw + n_vars * M_pad * N * bo))
    # Output as [n_vars, M_pad, N] keeps block last-two dims (tm, tn) tiling-legal
    # for any target_window; the final transpose only touches the small output.
    out_shape = jax.ShapeDtypeStruct((n_vars, M_pad, N), x3.dtype)

    if full_k:
        out = pl.pallas_call(
            _mm_bias_kernel,
            out_shape=out_shape,
            grid_spec=pltpu.PrefetchScalarGridSpec(
                num_scalar_prefetch=0,
                grid=(n_vars, M_pad // tm, N // tn),
                in_specs=[
                    pl.BlockSpec((tm, K), lambda v, i, j: (i, v)),
                    pl.BlockSpec((None, K, tn), lambda v, i, j: (v, 0, j)),
                    pl.BlockSpec((None, 1, tn), lambda v, i, j: (v, 0, j)),
                ],
                out_specs=pl.BlockSpec((None, tm, tn), lambda v, i, j: (v, i, j)),
            ),
            compiler_params=_compiler_params(3, 0, fp),
            cost_estimate=cost,
        )(x2, w3, b3)
    else:
        out = pl.pallas_call(
            _make_mm_bias_acc_kernel(3),
            out_shape=out_shape,
            grid_spec=pltpu.PrefetchScalarGridSpec(
                num_scalar_prefetch=0,
                grid=(n_vars, M_pad // tm, N // tn, K // tk),
                in_specs=[
                    pl.BlockSpec((tm, tk), lambda v, i, j, k: (i, v * kN + k)),
                    pl.BlockSpec((None, tk, tn), lambda v, i, j, k: (v, k, j)),
                    pl.BlockSpec((None, 1, tn), lambda v, i, j, k: (v, 0, j)),
                ],
                out_specs=pl.BlockSpec((None, tm, tn),
                                       lambda v, i, j, k: (v, i, j)),
                scratch_shapes=[pltpu.VMEM((tm, tn), jnp.float32)],
            ),
            compiler_params=_compiler_params(3, 1, fp),
            cost_estimate=cost,
        )(x2, w3, b3)

    out = out[:, :B, :] if M_pad > B else out
    return jnp.transpose(out, (1, 0, 2))             # [B, n_vars, N]


# ---------------------------------------------------------------------------
# Public wrapper (Flatten_Head.forward)
# ---------------------------------------------------------------------------
def flatten_head_forward(x, weight, bias, *, individual: bool):
    """x: [B, n_vars, d_model, patch_num]
       weight: [n_w, nf, TW]; bias: [n_w, TW]  (n_w = n_vars if individual else 1)
    Returns [B, n_vars, TW]."""
    B, n_vars, d_model, patch_num = x.shape
    nf = d_model * patch_num
    n_w, nf_w, TW = weight.shape
    assert nf_w == nf
    assert n_w == (n_vars if individual else 1)
    # TODO(synk): head_dropout > 0 in training mode not implemented (identity in eval).

    if not individual:
        x2d = x.reshape(B * n_vars, nf)               # contiguous, no copy
        out2d = _linear_shared(x2d, weight[0], bias[0])
        return out2d.reshape(B, n_vars, TW)

    x3 = x.reshape(B, n_vars, nf)                     # contiguous, no copy
    return _linear_individual(x3, weight, bias)


def _reference(x, weight, bias, *, individual: bool):
    B, n_vars, d_model, patch_num = x.shape
    xf = x.reshape(B, n_vars, d_model * patch_num)
    hp = jax.lax.Precision.HIGHEST
    if individual:
        return jnp.einsum("bvf,vft->bvt", xf, weight, precision=hp) + bias[None, :, :]
    return jnp.einsum("bvf,ft->bvt", xf, weight[0], precision=hp) + bias[0][None, None, :]


if __name__ == "__main__":
    key = jax.random.PRNGKey(0)
    ks = jax.random.split(key, 8)

    # Small shapes consistent with the module (Model uses individual=0).
    B, n_vars, d_model, patch_num = 2, 4, 16, 16
    nf = d_model * patch_num          # 256
    TW = 24

    x = jax.random.normal(ks[0], (B, n_vars, d_model, patch_num), dtype=jnp.float32)
    bound = 1.0 / jnp.sqrt(jnp.float32(nf))
    w_shared = jax.random.uniform(ks[1], (1, nf, TW), minval=-bound, maxval=bound)
    b_shared = jax.random.uniform(ks[2], (1, TW), minval=-bound, maxval=bound)
    w_indiv = jax.random.uniform(ks[3], (n_vars, nf, TW), minval=-bound, maxval=bound)
    b_indiv = jax.random.uniform(ks[4], (n_vars, TW), minval=-bound, maxval=bound)

    head_fwd = jax.jit(flatten_head_forward, static_argnames=("individual",))

    # Shared head: full-K fast path, single fused matmul over B*n_vars rows.
    out_s = jax.block_until_ready(head_fwd(x, w_shared, b_shared, individual=False))
    ref_s = _reference(x, w_shared, b_shared, individual=False)
    assert out_s.shape == (B, n_vars, TW)
    assert jnp.allclose(out_s, ref_s, atol=1e-5, rtol=1e-5)

    # Individual head: single batched pallas_call over n_vars.
    out_i = jax.block_until_ready(head_fwd(x, w_indiv, b_indiv, individual=True))
    ref_i = _reference(x, w_indiv, b_indiv, individual=True)
    assert out_i.shape == (B, n_vars, TW)
    assert jnp.allclose(out_i, ref_i, atol=1e-5, rtol=1e-5)

    # Larger shared case: exercises M padding (24 -> 32), tm halving for >=2
    # parallel blocks, and a lane-dense 128-wide output.
    B2, nv2, dm2, pn2, tw2 = 2, 12, 32, 32, 128
    nf2 = dm2 * pn2                   # 1024
    x2 = jax.random.normal(ks[5], (B2, nv2, dm2, pn2), dtype=jnp.float32)
    bound2 = 1.0 / jnp.sqrt(jnp.float32(nf2))
    w2 = jax.random.uniform(ks[6], (1, nf2, tw2), minval=-bound2, maxval=bound2)
    b2 = jax.random.uniform(ks[7], (1, tw2), minval=-bound2, maxval=bound2)
    out2 = jax.block_until_ready(head_fwd(x2, w2, b2, individual=False))
    ref2 = _reference(x2, w2, b2, individual=False)
    assert out2.shape == (B2, nv2, tw2)
    assert jnp.allclose(out2, ref2, atol=1e-4, rtol=1e-4)

    # Exercise the K-tiled accumulator kernels (fallback path for very large nf).
    out3 = jax.block_until_ready(
        _linear_shared(x2.reshape(B2 * nv2, nf2), w2[0], b2[0], force_k_tiled=True))
    assert jnp.allclose(out3.reshape(B2, nv2, tw2), ref2, atol=1e-4, rtol=1e-4)

    out4 = jax.block_until_ready(
        _linear_individual(x.reshape(B, n_vars, nf), w_indiv, b_indiv,
                           force_k_tiled=True))
    assert jnp.allclose(out4, ref_i, atol=1e-5, rtol=1e-5)

    # bf16 inputs (halves the dominant HBM stream for this memory-bound op),
    # with f32 accumulation inside the kernel.
    xb, wb, bb = (x.astype(jnp.bfloat16), w_shared.astype(jnp.bfloat16),
                  b_shared.astype(jnp.bfloat16))
    out_b = jax.block_until_ready(head_fwd(xb, wb, bb, individual=False))
    ref_b = _reference(xb, wb, bb, individual=False)
    assert out_b.dtype == jnp.bfloat16
    assert jnp.allclose(out_b.astype(jnp.float32), ref_b.astype(jnp.float32),
                        atol=2e-2, rtol=2e-2)

    print("KERNEL_OK")
</pallas_src>

<mosaic_0001>
module attributes {stable_mosaic.version = 11 : i64} {
  func.func @_mm_bias_kernel(%arg0: i32, %arg1: i32, %arg2: memref<8x256xf32, #tpu.memory_space<vmem>>, %arg3: memref<256x24xf32, #tpu.memory_space<vmem>>, %arg4: memref<1x24xf32, #tpu.memory_space<vmem>>, %arg5: memref<8x24xf32, #tpu.memory_space<vmem>>) attributes {dimension_semantics = [#tpu.dimension_semantics<parallel>, #tpu.dimension_semantics<parallel>], iteration_bounds = array<i64: 1, 1>, scalar_prefetch = 0 : i64, scratch_operands = 0 : i64, tpu.core_type = #tpu.core_type<tc>, window_params = [{transform_indices = @transform_0, window_bounds = array<i64: 8, 256>}, {transform_indices = @transform_1, window_bounds = array<i64: 256, 24>}, {transform_indices = @transform_2, window_bounds = array<i64: 1, 24>}, {transform_indices = @transform_3, window_bounds = array<i64: 8, 24>}]} {
    %c0 = arith.constant 0 : index
    %c0_0 = arith.constant 0 : index
    %0 = vector.load %arg2[%c0, %c0_0] : memref<8x256xf32, #tpu.memory_space<vmem>>, vector<8x256xf32>
    %c0_1 = arith.constant 0 : index
    %c0_2 = arith.constant 0 : index
    %1 = vector.load %arg3[%c0_1, %c0_2] : memref<256x24xf32, #tpu.memory_space<vmem>>, vector<256x24xf32>
    %cst = arith.constant dense<0.000000e+00> : vector<8x24xf32>
    %2 = tpu.matmul %0, %1, %cst {dimension_numbers = #tpu.dot_dimension_numbers<[1], [0], [0], [1], [0, 0, 1, 1], [], []>} : vector<8x256xf32>, vector<256x24xf32>, vector<8x24xf32> -> vector<8x24xf32>
    %c0_3 = arith.constant 0 : index
    %c0_4 = arith.constant 0 : index
    %3 = vector.load %arg4[%c0_3, %c0_4] : memref<1x24xf32, #tpu.memory_space<vmem>>, vector<1x24xf32>
    %4 = vector.broadcast %3 : vector<1x24xf32> to vector<8x24xf32>
    %5 = arith.addf %2, %4 : vector<8x24xf32>
    %c0_5 = arith.constant 0 : index
    %c0_6 = arith.constant 0 : index
    %6 = vector.load %arg5[%c0_5, %c0_6] : memref<8x24xf32, #tpu.memory_space<vmem>>, vector<8x24xf32>
    tpu.vector_store %arg5[%c0_5, %c0_6], %5 {strides = array<i32>} : memref<8x24xf32, #tpu.memory_space<vmem>>, vector<8x24xf32>,
    return
  }
  func.func @transform_0(%arg0: i32, %arg1: i32) -> (i32, i32) {
    %c0_i32 = arith.constant 0 : i32
    %c0_i32_0 = arith.constant 0 : i32
    return %arg0, %c0_i32 : i32, i32
  }
  func.func @transform_1(%arg0: i32, %arg1: i32) -> (i32, i32) {
    %c0_i32 = arith.constant 0 : i32
    %c0_i32_0 = arith.constant 0 : i32
    return %c0_i32, %arg1 : i32, i32
  }
  func.func @transform_2(%arg0: i32, %arg1: i32) -> (i32, i32) {
    %c0_i32 = arith.constant 0 : i32
    %c0_i32_0 = arith.constant 0 : i32
    return %c0_i32, %arg1 : i32, i32
  }
  func.func @transform_3(%arg0: i32, %arg1: i32) -> (i32, i32) {
    %c0_i32 = arith.constant 0 : i32
    return %arg0, %arg1 : i32, i32
  }
}

</mosaic_0001>

<llo_original>
// kernel: flatten_head_forward.1
$region0: #{flatten_head_forward.1}
  #allocation0 [shape = 'u32[]', space=smem, size = 0x4, offset = 0x4, fixed_abs, tag = 'smem constant byte address 0x4 - core index']
  #allocation1 [shape = 'u32[144,128]{1,0:T(1,128)}', space=vmem, size = 0x12000, scoped, tag = 'internal scratch']
  %s0 = inlined_call_operand.vmem [shape: f32[8,256], index: 0, kind: input, shape index: {}]
  %s1 = inlined_call_operand.vmem [shape: f32[256,24], index: 1, kind: input, shape index: {}]
  %s2 = inlined_call_operand.vmem [shape: f32[1,24], index: 2, kind: input, shape index: {}]
  %s3 = inlined_call_operand.hbm [shape: f32[8,24], index: 3, kind: output, shape index: {}]
  %s4 = sld [smem:[#allocation0]]
  $region22: #{flatten_head_forward.1} parent=0
    _
  %s6 = ssub.s32 1, %s4
  %s7 = scalar_select 0, %s6, %s4
  $region1: #{flatten_head_forward.1} parent=0
    #allocation2 [shape = 'u8[4096]{0}', space=vmem, size = 0x1000, scoped, tag = 'output window, operand 0, single buffered']
    #allocation3 [shape = 's32[1]{0}', space=sflag, size = 0x4, scoped, tag = 'scoped memory for flatten_head_forward.1']
    %8 = vsyncpa [#allocation3], 0
    // Predicated region
    $region2: #{flatten_head_forward.1} parent=1 // pred_check
      _
    $region3: #{flatten_head_forward.1} parent=1 // pred_check_branch
      %10 = sbr.rel (0) target = $region5
    $region4: #{flatten_head_forward.1} parent=1 // pred_region
      _
    $region5: #{flatten_head_forward.1} parent=1 // pred_fallthru
      _
    // Predicated region
    $region6: #{flatten_head_forward.1} parent=1 // pred_check
      _
    $region7: #{flatten_head_forward.1} parent=1 // pred_check_branch
      %12 = sbr.rel (0) target = $region9
    $region8: #{flatten_head_forward.1} parent=1 // pred_region
      _
    $region9: #{flatten_head_forward.1} parent=1 // pred_fallthru
      _
    // Predicated region
    $region10: #{flatten_head_forward.1} parent=1 // pred_check
      _
    $region11: #{flatten_head_forward.1} parent=1 // pred_check_branch
      %14 = sbr.rel (0) target = $region13
    $region12: #{flatten_head_forward.1} parent=1 // pred_region
      _
    $region13: #{flatten_head_forward.1} parent=1 // pred_fallthru
      _
    %v15 = vld [vmem:[%s0] sm:$0xff]
    %v16 = vld [vmem:[%s0 + $0x8] sm:$0xff]
    %v17 = vld [vmem:[%s1] sm:$0xff]
    %v18 = vld [vmem:[%s1 + $0x8] sm:$0xff]
    %v19 = vld [vmem:[%s1 + $0x10] sm:$0xff]
    %v20 = vld [vmem:[%s1 + $0x18] sm:$0xff]
    %v21 = vld [vmem:[%s1 + $0x20] sm:$0xff]
    %v22 = vld [vmem:[%s1 + $0x28] sm:$0xff]
    %v23 = vld [vmem:[%s1 + $0x30] sm:$0xff]
    %v24 = vld [vmem:[%s1 + $0x38] sm:$0xff]
    %v25 = vld [vmem:[%s1 + $0x40] sm:$0xff]
    %v26 = vld [vmem:[%s1 + $0x48] sm:$0xff]
    %v27 = vld [vmem:[%s1 + $0x50] sm:$0xff]
    %v28 = vld [vmem:[%s1 + $0x58] sm:$0xff]
    %v29 = vld [vmem:[%s1 + $0x60] sm:$0xff]
    %v30 = vld [vmem:[%s1 + $0x68] sm:$0xff]
    %v31 = vld [vmem:[%s1 + $0x70] sm:$0xff]
    %v32 = vld [vmem:[%s1 + $0x78] sm:$0xff]
    %v33 = vld [vmem:[%s1 + $0x80] sm:$0xff]
    %v34 = vld [vmem:[%s1 + $0x88] sm:$0xff]
    %v35 = vld [vmem:[%s1 + $0x90] sm:$0xff]
    %v36 = vld [vmem:[%s1 + $0x98] sm:$0xff]
    %v37 = vld [vmem:[%s1 + $0xa0] sm:$0xff]
    %v38 = vld [vmem:[%s1 + $0xa8] sm:$0xff]
    %v39 = vld [vmem:[%s1 + $0xb0] sm:$0xff]
    %v40 = vld [vmem:[%s1 + $0xb8] sm:$0xff]
    %v41 = vld [vmem:[%s1 + $0xc0] sm:$0xff]
    %v42 = vld [vmem:[%s1 + $0xc8] sm:$0xff]
    %v43 = vld [vmem:[%s1 + $0xd0] sm:$0xff]
    %v44 = vld [vmem:[%s1 + $0xd8] sm:$0xff]
    %v45 = vld [vmem:[%s1 + $0xe0] sm:$0xff]
    %v46 = vld [vmem:[%s1 + $0xe8] sm:$0xff]
    %v47 = vld [vmem:[%s1 + $0xf0] sm:$0xff]
    %v48 = vld [vmem:[%s1 + $0xf8] sm:$0xff]
    %v49 = vld [vmem:[%s2] sm:$0x1]
    %v51 = vlaneseq
    %v52 = vshrl.u32 %v51, 7
    %v53 = vsub.s32 0, %v52
    %v54 = vrot.slane %v49, %v53
    %56 = vmatprep.subr.mxu0 0.0
    %57 = vmatpush1.msra.mxu0 %v32
    %58 = vmatprep.subr.mxu0 0.0
    %59 = vmatpush1.msra.mxu0 %v31
    %60 = vmatprep.subr.mxu0 0.0
    %61 = vmatpush1.msra.mxu0 %v30
    %62 = vmatprep.subr.mxu0 0.0
    %63 = vmatpush1.msra.mxu0 %v29
    %64 = vmatprep.subr.mxu0 0.0
    %65 = vmatpush1.msra.mxu0 %v28
    %66 = vmatprep.subr.mxu0 0.0
    %67 = vmatpush1.msra.mxu0 %v27
    %68 = vmatprep.subr.mxu0 0.0
    %69 = vmatpush1.msra.mxu0 %v26
    %70 = vmatprep.subr.mxu0 0.0
    %71 = vmatpush1.msra.mxu0 %v25
    %72 = vmatprep.subr.mxu0 0.0
    %73 = vmatpush1.msra.mxu0 %v24
    %74 = vmatprep.subr.mxu0 0.0
    %75 = vmatpush1.msra.mxu0 %v23
    %76 = vmatprep.subr.mxu0 0.0
    %77 = vmatpush1.msra.mxu0 %v22
    %78 = vmatprep.subr.mxu0 0.0
    %79 = vmatpush1.msra.mxu0 %v21
    %80 = vmatprep.subr.mxu0 0.0
    %81 = vmatpush1.msra.mxu0 %v20
    %82 = vmatprep.subr.mxu0 0.0
    %83 = vmatpush1.msra.mxu0 %v19
    %84 = vmatprep.subr.mxu0 0.0
    %85 = vmatpush1.msra.mxu0 %v18
    %86 = vmatprep.subr.mxu0 0.0
    %87 = vmatpush1.msra.mxu0 %v17
    %88 = vmatprep.subr.mxu0 0.0
    %89 = vmatpush2.msra.mxu0 %v48
    %90 = vmatprep.subr.mxu0 0.0
    %91 = vmatpush2.msra.mxu0 %v47
    %92 = vmatprep.subr.mxu0 0.0
    %93 = vmatpush2.msra.mxu0 %v46
    %94 = vmatprep.subr.mxu0 0.0
    %95 = vmatpush2.msra.mxu0 %v45
    %96 = vmatprep.subr.mxu0 0.0
    %97 = vmatpush2.msra.mxu0 %v44
    %98 = vmatprep.subr.mxu0 0.0
    %99 = vmatpush2.msra.mxu0 %v43
    %100 = vmatprep.subr.mxu0 0.0
    %101 = vmatpush2.msra.mxu0 %v42
    %102 = vmatprep.subr.mxu0 0.0
    %103 = vmatpush2.msra.mxu0 %v41
    %104 = vmatprep.subr.mxu0 0.0
    %105 = vmatpush2.msra.mxu0 %v40
    %106 = vmatprep.subr.mxu0 0.0
    %107 = vmatpush2.msra.mxu0 %v39
    %108 = vmatprep.subr.mxu0 0.0
    %109 = vmatpush2.msra.mxu0 %v38
    %110 = vmatprep.subr.mxu0 0.0
    %111 = vmatpush2.msra.mxu0 %v37
    %112 = vmatprep.subr.mxu0 0.0
    %113 = vmatpush2.msra.mxu0 %v36
    %114 = vmatprep.subr.mxu0 0.0
    %115 = vmatpush2.msra.mxu0 %v35
    %116 = vmatprep.subr.mxu0 0.0
    %117 = vmatpush2.msra.mxu0 %v34
    %118 = vmatprep.subr.mxu0 0.0
    %119 = vmatpush2.msra.mxu0 %v33
    %120 = vmatprep.mubr.f32.mxu0 %v16
    %121 = vmatmul.mubr.f32.gmra.mxu0 %v15
    %v122 = vpop.f32.mrf.mxu0
    %v123 = vadd.f32 %v54, %v122
    %v124 = vpop.f32.mrf.mxu0
    %125 = vdwg.mxu0
    %vm126 = vcmask 195584
    %127 = vst.msk [vmem:[#allocation2] sm:$0xff] %vm126, %v123
    // Predicated region
    $region14: #{flatten_head_forward.1} parent=1 // pred_check
      _
    $region15: #{flatten_head_forward.1} parent=1 // pred_check_branch
      %129 = sbr.rel (0) target = $region17
    $region16: #{flatten_head_forward.1} parent=1 // pred_region
      %s131 = ssub.s32 128, 128
      %132 = vsyncadd [#allocation3], %s131
      %s134 = sshll.u32 [#allocation2], 4
      %s135 = int_to_ptr.vmem [resolvable:$true] %s134
      %137 = dma.vmem_to_hbm [thread:$0]  %s135, 128, %s3, [#allocation3]
    $region17: #{flatten_head_forward.1} parent=1 // pred_fallthru
      _
    // Predicated region
    $region18: #{flatten_head_forward.1} parent=1 // pred_check
      _
    $region19: #{flatten_head_forward.1} parent=1 // pred_check_branch
      %139 = sbr.rel (0) target = $region21
    $region20: #{flatten_head_forward.1} parent=1 // pred_region
      %140 = dma.done [#allocation3], 128
    $region21: #{flatten_head_forward.1} parent=1 // pred_fallthru
      _
    %141 = vsyncpa [#allocation3], 1

</llo_original>
